<compile_context>
chip_gen: v5e
topology: v5e:2x2
jax: 0.10.0
libtpu: 0.0.40
codegen_flags: <defaults>
</compile_context>

<pallas_src>
import functools
import math
from typing import NamedTuple

import jax
import jax.numpy as jnp
from jax import lax
from jax.experimental import pallas as pl
from jax.experimental.pallas import tpu as pltpu


def _round_up(x, m):
    return (x + m - 1) // m * m


# --------------------------------------------------------------------------- #
# Chip-aware configuration
# --------------------------------------------------------------------------- #
class _ChipConfig(NamedTuple):
    name: str
    two_tc: bool             # 2 TensorCores -> keep >= 2 grid blocks for small problems
    plain_tile_bytes: int    # rows / channels_first kernels (no big temporaries)
    packed_tile_bytes: int   # packed kernel (carries ~4 full-size f32 temporaries)
    vmem_limit_bytes: int
    packed_pmax: int         # cap on k*C lanes for the packed path
    bf16_vpu: bool           # bf16 VALU available (v6e/v7x)


@functools.lru_cache(maxsize=1)
def _chip_config():
    kind = ""
    try:
        kind = jax.devices()[0].device_kind.lower()
    except Exception:
        pass
    if ("v5 lite" in kind) or ("v5e" in kind) or ("v5lite" in kind):
        # 1 TC, 128 MiB VMEM, weak MXU for wide f32 reduces -> cap packed lanes at 128.
        return _ChipConfig("v5e", False, 4 << 20, 2 << 20, 64 << 20, 128, False)
    if "v7" in kind:
        # 2 TCs/chip, 64 MiB VMEM per TC -> tighter VMEM budget, keep packed tiles at 2 MiB.
        return _ChipConfig("v7x", True, 4 << 20, 2 << 20, 40 << 20, 512, True)
    if "v6" in kind:
        return _ChipConfig("v6e", False, 4 << 20, 2 << 20, 64 << 20, 512, True)
    if ("v5" in kind) or ("v4" in kind):
        # v5p / v4: large VMEM, strong MXU; v4 has 2 TCs.
        return _ChipConfig("v5p", "v4" in kind, 4 << 20, 2 << 20, 64 << 20, 512, True)
    # Unknown backend: conservative defaults.
    return _ChipConfig("unknown", False, 2 << 20, 2 << 20, 32 << 20, 512, False)


# --------------------------------------------------------------------------- #
# Kernels
# --------------------------------------------------------------------------- #
def _affine_epilogue(xc, inv, w, b, out_dtype, bf16_epilogue):
    if bf16_epilogue:
        # v6e/v7x + bf16 I/O: keep mean/var in f32, do scale/shift in bf16
        # (packs 2x elements per vreg, keeps the kernel HBM-bound at 3.2 TB/s).
        y = (xc * inv).astype(jnp.bfloat16)
        return (y * w.astype(jnp.bfloat16) + b.astype(jnp.bfloat16)).astype(out_dtype)
    return (xc * inv * w + b).astype(out_dtype)


def _ln_rows_kernel(x_ref, w_ref, b_ref, o_ref, *, eps, bf16_epilogue):
    # x_ref: (TM, C); normalize each row over the last (lane) axis.
    # Ragged last block: padded rows may contain garbage -> harmless, Pallas
    # never writes them back to the visible output region.
    x = x_ref[...].astype(jnp.float32)
    mean = jnp.mean(x, axis=-1, keepdims=True)
    xc = x - mean
    var = jnp.mean(xc * xc, axis=-1, keepdims=True)           # biased variance
    inv = lax.rsqrt(var + eps)
    o_ref[...] = _affine_epilogue(xc, inv, w_ref[...], b_ref[...],
                                  o_ref.dtype, bf16_epilogue)


def _ln_packed_kernel(x_ref, segr_ref, segc_ref, w_ref, b_ref, o_ref, *,
                      inv_c, eps, bf16_epilogue):
    # x_ref: (TM, P) with P = k*C lanes; each lane-row packs k logical rows.
    # Segment matrix built in-kernel from tiny (P,1)/(1,P) segment-id vectors:
    # S[i,j] = 1 iff lanes i,j belong to the same C-wide segment.  x @ S puts,
    # in every lane, the sum of its segment (segmented reduce + broadcast in a
    # single MXU pass).  S is 0/1 -> exact in bf16; no Precision.HIGHEST needed.
    x = x_ref[...].astype(jnp.float32)
    s = (segr_ref[...] == segc_ref[...]).astype(jnp.float32)   # (P,1)==(1,P) -> (P,P)

    # Exact-ish segment mean without HIGHEST: split x into its bf16 head and
    # the f32 residual; two default-precision (single-pass) MXU matmuls.
    x_hi = x.astype(jnp.bfloat16).astype(jnp.float32)
    x_lo = x - x_hi
    seg_sum = (jnp.dot(x_hi, s, preferred_element_type=jnp.float32)
               + jnp.dot(x_lo, s, preferred_element_type=jnp.float32))
    mean = seg_sum * inv_c
    xc = x - mean
    # Variance: xc is already centered, so one default-precision pass only
    # loses ~2^-9 relative on a positive sum (perf review: drop HIGHEST here).
    var = jnp.dot(xc * xc, s, preferred_element_type=jnp.float32) * inv_c
    inv = lax.rsqrt(var + eps)
    o_ref[...] = _affine_epilogue(xc, inv, w_ref[...], b_ref[...],
                                  o_ref.dtype, bf16_epilogue)


def _ln_cf_kernel(x_ref, w_ref, b_ref, o_ref, *, eps, bf16_epilogue):
    # x_ref: (C, TS) -- channels on sublanes, flattened spatial on lanes.
    # w_ref/b_ref: (C, 1), lane-broadcast inside the kernel.
    x = x_ref[...].astype(jnp.float32)
    mean = jnp.mean(x, axis=0, keepdims=True)
    xc = x - mean
    var = jnp.mean(xc * xc, axis=0, keepdims=True)             # biased variance
    inv = lax.rsqrt(var + eps)
    o_ref[...] = _affine_epilogue(xc, inv, w_ref[...], b_ref[...],
                                  o_ref.dtype, bf16_epilogue)


# --------------------------------------------------------------------------- #
# Wrappers
# --------------------------------------------------------------------------- #
def _pick_row_tile(n_rows, lane_width, itemsize, tile_bytes, two_tc):
    """Rows per block: ~tile_bytes (counting 128-lane padding, real itemsize),
    multiple of 8; on 2-TC chips keep >= 2 grid blocks when possible."""
    row_bytes = _round_up(lane_width, 128) * itemsize
    tm = tile_bytes // max(row_bytes, 1)
    tm = max(8, min(int(tm), 8192) // 8 * 8)
    tm = min(tm, _round_up(n_rows, 8))
    if two_tc and tm >= n_rows and n_rows > 8:
        tm = max(8, _round_up((n_rows + 1) // 2, 8))
    return tm


def _layer_norm_rows_plain(x2d, weight_f32, bias_f32, eps, cfg, bf16_epilogue):
    """LayerNorm over the last axis of a 2-D (rows, C) array, one row per
    sublane-row (masked lane stores when C % 128 != 0)."""
    M, C = x2d.shape
    itemsize = x2d.dtype.itemsize
    w2 = weight_f32.reshape(1, C)
    b2 = bias_f32.reshape(1, C)
    tm = _pick_row_tile(M, C, itemsize, cfg.plain_tile_bytes, cfg.two_tc)
    grid = (pl.cdiv(M, tm),)                 # ragged last block handled by Pallas
    return pl.pallas_call(
        functools.partial(_ln_rows_kernel, eps=eps, bf16_epilogue=bf16_epilogue),
        out_shape=jax.ShapeDtypeStruct((M, C), x2d.dtype),
        grid_spec=pltpu.PrefetchScalarGridSpec(
            num_scalar_prefetch=0,
            grid=grid,
            in_specs=[
                pl.BlockSpec((tm, C), lambda i: (i, 0)),
                pl.BlockSpec((1, C), lambda i: (0, 0)),
                pl.BlockSpec((1, C), lambda i: (0, 0)),
            ],
            out_specs=pl.BlockSpec((tm, C), lambda i: (i, 0)),
        ),
        compiler_params=pltpu.CompilerParams(
            dimension_semantics=("parallel",),
            vmem_limit_bytes=cfg.vmem_limit_bytes),
    )(x2d, w2, b2)


def _layer_norm_rows(x2d, weight_f32, bias_f32, eps, cfg, bf16_epilogue):
    """channels_last LayerNorm over the last axis of (rows, C)."""
    M, C = x2d.shape
    itemsize = x2d.dtype.itemsize

    # Lane densification: whenever C is not a multiple of 128, pack k consecutive
    # rows into one super-row of P = k*C lanes (free reshape, rows contiguous) so
    # the output is written with unmasked 128-lane stores.
    k = 1
    if C % 128 != 0:
        k = 128 // math.gcd(C, 128)          # smallest k with k*C % 128 == 0
        if k * C > cfg.packed_pmax:
            k = 1

    if k == 1:
        return _layer_norm_rows_plain(x2d, weight_f32, bias_f32, eps, cfg,
                                      bf16_epilogue)

    P = k * C
    M_main = (M // k) * k
    outs = []
    if M_main > 0:
        Mp = M_main // k
        xp = x2d[:M_main].reshape(Mp, P)
        seg = jnp.arange(P, dtype=jnp.int32) // C
        seg_row = seg.reshape(P, 1)
        seg_col = seg.reshape(1, P)
        wp = jnp.tile(weight_f32, k).reshape(1, P)
        bp = jnp.tile(bias_f32, k).reshape(1, P)
        tm = _pick_row_tile(Mp, P, itemsize, cfg.packed_tile_bytes, cfg.two_tc)
        out_p = pl.pallas_call(
            functools.partial(_ln_packed_kernel, inv_c=1.0 / C, eps=eps,
                              bf16_epilogue=bf16_epilogue),
            out_shape=jax.ShapeDtypeStruct((Mp, P), x2d.dtype),
            grid_spec=pltpu.PrefetchScalarGridSpec(
                num_scalar_prefetch=0,
                grid=(pl.cdiv(Mp, tm),),
                in_specs=[
                    pl.BlockSpec((tm, P), lambda i: (i, 0)),
                    pl.BlockSpec((P, 1), lambda i: (0, 0)),
                    pl.BlockSpec((1, P), lambda i: (0, 0)),
                    pl.BlockSpec((1, P), lambda i: (0, 0)),
                    pl.BlockSpec((1, P), lambda i: (0, 0)),
                ],
                out_specs=pl.BlockSpec((tm, P), lambda i: (i, 0)),
            ),
            compiler_params=pltpu.CompilerParams(
                dimension_semantics=("parallel",),
                vmem_limit_bytes=cfg.vmem_limit_bytes),
        )(xp, seg_row, seg_col, wp, bp)
        outs.append(out_p.reshape(M_main, C))
    if M_main < M:
        # <= k-1 remainder rows: run the plain kernel on the tail only, instead
        # of abandoning lane-dense stores for the whole tensor.
        outs.append(_layer_norm_rows_plain(x2d[M_main:], weight_f32, bias_f32,
                                           eps, cfg, bf16_epilogue))
    return outs[0] if len(outs) == 1 else jnp.concatenate(outs, axis=0)


def _layer_norm_channels_first(x, weight_f32, bias_f32, eps, cfg, bf16_epilogue):
    """LayerNorm over axis 1 of NCHW, without any transpose: x is viewed as
    (N, C, H*W); each block is (C, TS) and the reduction runs over sublanes."""
    N, C, H, W = x.shape
    HW = H * W
    x3 = x.reshape(N, C, HW)                 # free reshape (contiguous dims)
    itemsize = x.dtype.itemsize

    # Spatial (lane) tile: ~plain_tile_bytes in the *input* dtype, multiple of
    # 128 unless it covers the whole spatial extent (full-dim blocks are legal).
    c_pad = _round_up(C, 8)
    ts = cfg.plain_tile_bytes // max(c_pad * itemsize, 1)
    if ts >= HW or HW <= 128:
        ts = HW
    else:
        ts = max(128, (ts // 128) * 128)
    if cfg.two_tc and N == 1 and ts >= HW and HW >= 256:
        ts = max(128, _round_up((HW + 1) // 2, 128))   # 2 blocks for 2 TCs (v7x)

    grid = (N, pl.cdiv(HW, ts))
    w2 = weight_f32.reshape(C, 1)
    b2 = bias_f32.reshape(C, 1)
    out = pl.pallas_call(
        functools.partial(_ln_cf_kernel, eps=eps, bf16_epilogue=bf16_epilogue),
        out_shape=jax.ShapeDtypeStruct((N, C, HW), x.dtype),
        grid_spec=pltpu.PrefetchScalarGridSpec(
            num_scalar_prefetch=0,
            grid=grid,
            in_specs=[
                pl.BlockSpec((None, C, ts), lambda n, j: (n, 0, j)),
                pl.BlockSpec((C, 1), lambda n, j: (0, 0)),
                pl.BlockSpec((C, 1), lambda n, j: (0, 0)),
            ],
            out_specs=pl.BlockSpec((None, C, ts), lambda n, j: (n, 0, j)),
        ),
        compiler_params=pltpu.CompilerParams(
            dimension_semantics=("parallel", "parallel"),
            vmem_limit_bytes=cfg.vmem_limit_bytes),
    )(x3, w2, b2)
    return out.reshape(N, C, H, W)


class LayerNormPallas:
    """Forward-only mirror of the PyTorch LayerNorm module (channels_last /
    channels_first)."""
    # TODO(synk): forward only; parameter gradients / training not implemented.

    def __init__(self, normalized_shape, eps=1e-6, data_format="channels_last"):
        if data_format not in ("channels_last", "channels_first"):
            raise ValueError(f"not support data format '{data_format}'")
        self.eps = float(eps)
        self.data_format = data_format
        self.normalized_shape = (normalized_shape,)
        self.weight = jnp.ones((normalized_shape,), jnp.float32)
        self.bias = jnp.zeros((normalized_shape,), jnp.float32)

    def __call__(self, x):
        C = self.normalized_shape[0]
        cfg = _chip_config()
        w = jnp.asarray(self.weight, jnp.float32)
        b = jnp.asarray(self.bias, jnp.float32)
        bf16_epi = bool(cfg.bf16_vpu and x.dtype == jnp.bfloat16)
        if self.data_format == "channels_last":
            assert x.shape[-1] == C
            lead = x.shape[:-1]
            y2d = _layer_norm_rows(x.reshape(-1, C), w, b, self.eps, cfg, bf16_epi)
            return y2d.reshape(*lead, C)
        else:
            assert x.ndim == 4 and x.shape[1] == C
            return _layer_norm_channels_first(x, w, b, self.eps, cfg, bf16_epi)


# --------------------------------------------------------------------------- #
# Pure-JAX references (exact PyTorch semantics)
# --------------------------------------------------------------------------- #
def _ref_channels_last(x, w, b, eps):
    x = x.astype(jnp.float32)
    mean = jnp.mean(x, axis=-1, keepdims=True)
    var = jnp.mean((x - mean) ** 2, axis=-1, keepdims=True)
    return (x - mean) / jnp.sqrt(var + eps) * w + b


def _ref_channels_first(x, w, b, eps):
    x = x.astype(jnp.float32)
    mean = jnp.mean(x, axis=1, keepdims=True)
    var = jnp.mean((x - mean) ** 2, axis=1, keepdims=True)
    xn = (x - mean) / jnp.sqrt(var + eps)
    return w[None, :, None, None] * xn + b[None, :, None, None]


if __name__ == "__main__":
    key = jax.random.PRNGKey(0)
    keys = jax.random.split(key, 12)

    # 1) channels_first NCHW (direct NCHW kernel, no transposes).
    x_cf = jax.random.normal(keys[0], (2, 4, 16, 16), jnp.float32)
    ln_cf = LayerNormPallas(4, eps=1e-6, data_format="channels_first")
    ln_cf.weight = 1.0 + 0.1 * jax.random.normal(keys[1], (4,), jnp.float32)
    ln_cf.bias = 0.1 * jax.random.normal(keys[2], (4,), jnp.float32)
    y_cf = jax.block_until_ready(ln_cf(x_cf))
    ref_cf = _ref_channels_first(x_cf, ln_cf.weight, ln_cf.bias, ln_cf.eps)
    assert y_cf.shape == x_cf.shape
    assert jnp.max(jnp.abs(y_cf - ref_cf)) < 1e-4

    # 2) channels_last, narrow C=32 (lane-packed MXU segmented-reduce path).
    x_cl = jax.random.normal(keys[3], (2, 8, 8, 32), jnp.float32)
    ln_cl = LayerNormPallas(32, eps=1e-6, data_format="channels_last")
    ln_cl.weight = 1.0 + 0.1 * jax.random.normal(keys[4], (32,), jnp.float32)
    ln_cl.bias = 0.1 * jax.random.normal(keys[5], (32,), jnp.float32)
    y_cl = jax.block_until_ready(ln_cl(x_cl))
    ref_cl = _ref_channels_last(x_cl, ln_cl.weight, ln_cl.bias, ln_cl.eps)
    assert y_cl.shape == x_cl.shape
    # Looser tolerance: variance rides a single default-precision MXU pass.
    assert jnp.max(jnp.abs(y_cl - ref_cl)) < 2e-2

    # 3) channels_last, narrow C=32 with M % k != 0 (packed prefix + plain tail).
    x_r = jax.random.normal(keys[6], (1, 5, 5, 32), jnp.float32)
    y_r = jax.block_until_ready(ln_cl(x_r))
    ref_r = _ref_channels_last(x_r, ln_cl.weight, ln_cl.bias, ln_cl.eps)
    assert y_r.shape == x_r.shape
    assert jnp.max(jnp.abs(y_r - ref_r)) < 2e-2

    # 4) channels_last, wide C=256 with a ragged row grid (plain lane path).
    x_w = jax.random.normal(keys[7], (2, 5, 5, 256), jnp.float32)
    ln_w = LayerNormPallas(256, eps=1e-6, data_format="channels_last")
    ln_w.weight = 1.0 + 0.1 * jax.random.normal(keys[8], (256,), jnp.float32)
    y_w = jax.block_until_ready(ln_w(x_w))
    ref_w = _ref_channels_last(x_w, ln_w.weight, ln_w.bias, ln_w.eps)
    assert y_w.shape == x_w.shape
    assert jnp.max(jnp.abs(y_w - ref_w)) < 1e-4

    # 5) channels_last, bf16 I/O, C=128 (dtype-sized tiles; bf16 epilogue on
    #    v6e/v7x, f32 epilogue elsewhere).
    x_b = jax.random.normal(keys[9], (2, 4, 4, 128), jnp.float32).astype(jnp.bfloat16)
    ln_b = LayerNormPallas(128, eps=1e-6, data_format="channels_last")
    ln_b.weight = 1.0 + 0.1 * jax.random.normal(keys[10], (128,), jnp.float32)
    ln_b.bias = 0.1 * jax.random.normal(keys[11], (128,), jnp.float32)
    y_b = jax.block_until_ready(ln_b(x_b))
    ref_b = _ref_channels_last(x_b, ln_b.weight, ln_b.bias, ln_b.eps)
    assert y_b.shape == x_b.shape and y_b.dtype == jnp.bfloat16
    assert jnp.max(jnp.abs(y_b.astype(jnp.float32) - ref_b)) < 1e-1

    print("KERNEL_OK")
</pallas_src>

<mosaic_0001>
module attributes {stable_mosaic.version = 11 : i64} {
  func.func @_ln_cf_kernel(%arg0: i32, %arg1: i32, %arg2: memref<1x4x256xf32, #tpu.memory_space<vmem>>, %arg3: memref<4x1xf32, #tpu.memory_space<vmem>>, %arg4: memref<4x1xf32, #tpu.memory_space<vmem>>, %arg5: memref<1x4x256xf32, #tpu.memory_space<vmem>>) attributes {dimension_semantics = [#tpu.dimension_semantics<parallel>, #tpu.dimension_semantics<parallel>], iteration_bounds = array<i64: 2, 1>, scalar_prefetch = 0 : i64, scratch_operands = 0 : i64, tpu.core_type = #tpu.core_type<tc>, window_params = [{transform_indices = @transform_0, window_bounds = array<i64: 1, 4, 256>}, {pipeline_mode = #tpu.pipeline_mode<synchronous>, transform_indices = @transform_1, window_bounds = array<i64: 4, 1>}, {pipeline_mode = #tpu.pipeline_mode<synchronous>, transform_indices = @transform_2, window_bounds = array<i64: 4, 1>}, {transform_indices = @transform_3, window_bounds = array<i64: 1, 4, 256>}]} {
    %c0 = arith.constant 0 : index
    %c0_0 = arith.constant 0 : index
    %c0_1 = arith.constant 0 : index
    %0 = vector.load %arg2[%c0, %c0_0, %c0_1] : memref<1x4x256xf32, #tpu.memory_space<vmem>>, vector<1x4x256xf32>
    %1 = vector.shape_cast %0 : vector<1x4x256xf32> to vector<4x256xf32>
    %cst = arith.constant dense<0.000000e+00> : vector<256xf32>
    %2 = vector.multi_reduction <add>, %1, %cst [0] : vector<4x256xf32> to vector<256xf32>
    %3 = vector.shape_cast %2 : vector<256xf32> to vector<1x256xf32>
    %cst_2 = arith.constant 4.000000e+00 : f32
    %4 = vector.broadcast %cst_2 : f32 to vector<1x256xf32>
    %5 = arith.divf %3, %4 : vector<1x256xf32>
    %6 = vector.broadcast %5 : vector<1x256xf32> to vector<4x256xf32>
    %7 = arith.subf %1, %6 : vector<4x256xf32>
    %8 = arith.mulf %7, %7 : vector<4x256xf32>
    %cst_3 = arith.constant dense<0.000000e+00> : vector<256xf32>
    %9 = vector.multi_reduction <add>, %8, %cst_3 [0] : vector<4x256xf32> to vector<256xf32>
    %10 = vector.shape_cast %9 : vector<256xf32> to vector<1x256xf32>
    %cst_4 = arith.constant 4.000000e+00 : f32
    %11 = vector.broadcast %cst_4 : f32 to vector<1x256xf32>
    %12 = arith.divf %10, %11 : vector<1x256xf32>
    %cst_5 = arith.constant 9.99999997E-7 : f32
    %13 = vector.broadcast %cst_5 : f32 to vector<1x256xf32>
    %14 = arith.addf %12, %13 : vector<1x256xf32>
    %15 = math.rsqrt %14 : vector<1x256xf32>
    %c0_6 = arith.constant 0 : index
    %c0_7 = arith.constant 0 : index
    %16 = vector.load %arg3[%c0_6, %c0_7] : memref<4x1xf32, #tpu.memory_space<vmem>>, vector<4x1xf32>
    %c0_8 = arith.constant 0 : index
    %c0_9 = arith.constant 0 : index
    %17 = vector.load %arg4[%c0_8, %c0_9] : memref<4x1xf32, #tpu.memory_space<vmem>>, vector<4x1xf32>
    %18 = vector.broadcast %15 : vector<1x256xf32> to vector<4x256xf32>
    %19 = arith.mulf %7, %18 : vector<4x256xf32>
    %20 = vector.broadcast %16 : vector<4x1xf32> to vector<4x256xf32>
    %21 = arith.mulf %19, %20 : vector<4x256xf32>
    %22 = vector.broadcast %17 : vector<4x1xf32> to vector<4x256xf32>
    %23 = arith.addf %21, %22 : vector<4x256xf32>
    %c0_10 = arith.constant 0 : index
    %c0_11 = arith.constant 0 : index
    %c0_12 = arith.constant 0 : index
    %24 = vector.load %arg5[%c0_10, %c0_11, %c0_12] : memref<1x4x256xf32, #tpu.memory_space<vmem>>, vector<1x4x256xf32>
    %25 = vector.shape_cast %24 : vector<1x4x256xf32> to vector<4x256xf32>
    %26 = vector.shape_cast %23 : vector<4x256xf32> to vector<1x4x256xf32>
    tpu.vector_store %arg5[%c0_10, %c0_11, %c0_12], %26 {strides = array<i32>} : memref<1x4x256xf32, #tpu.memory_space<vmem>>, vector<1x4x256xf32>,
    return
  }
  func.func @transform_0(%arg0: i32, %arg1: i32) -> (i32, i32, i32) {
    %c0_i32 = arith.constant 0 : i32
    %c0_i32_0 = arith.constant 0 : i32
    return %arg0, %c0_i32, %arg1 : i32, i32, i32
  }
  func.func @transform_1(%arg0: i32, %arg1: i32) -> (i32, i32) {
    %c0_i32 = arith.constant 0 : i32
    %c0_i32_0 = arith.constant 0 : i32
    %c0_i32_1 = arith.constant 0 : i32
    return %c0_i32, %c0_i32_0 : i32, i32
  }
  func.func @transform_2(%arg0: i32, %arg1: i32) -> (i32, i32) {
    %c0_i32 = arith.constant 0 : i32
    %c0_i32_0 = arith.constant 0 : i32
    %c0_i32_1 = arith.constant 0 : i32
    return %c0_i32, %c0_i32_0 : i32, i32
  }
  func.func @transform_3(%arg0: i32, %arg1: i32) -> (i32, i32, i32) {
    %c0_i32 = arith.constant 0 : i32
    %c0_i32_0 = arith.constant 0 : i32
    return %arg0, %c0_i32, %arg1 : i32, i32, i32
  }
}

</mosaic_0001>

<llo_original>
// kernel: tpu_custom_call.1
$region0: #{tpu_custom_call.1}
  #allocation0 [shape = 'u32[]', space=smem, size = 0x4, offset = 0x4, fixed_abs, tag = 'smem constant byte address 0x4 - core index']
  #allocation1 [shape = 'u32[72,128]{1,0:T(1,128)}', space=vmem, size = 0x9000, scoped, tag = 'internal scratch']
  %s0 = inlined_call_operand.hbm [shape: f32[2,4,256], index: 0, kind: input, shape index: {}]
  %s1 = inlined_call_operand.vmem [shape: f32[4,1], index: 1, kind: input, shape index: {}]
  %s2 = inlined_call_operand.vmem [shape: f32[4,1], index: 2, kind: input, shape index: {}]
  %s3 = inlined_call_operand.hbm [shape: f32[2,4,256], index: 3, kind: output, shape index: {}]
  %s4 = sld [smem:[#allocation0]]
  $region49: #{tpu_custom_call.1} parent=0
    _
  %s6 = ssub.s32 1, %s4
  %s7 = scalar_select 0, %s6, %s4
  $region1: #{tpu_custom_call.1} parent=0
    #allocation2 [shape = 'u8[8192]{0}', space=vmem, size = 0x2000, scoped, tag = 'input window, operand 0']
    #allocation3 [shape = 's32[2]{0}', space=sflag, size = 0x8, scoped, tag = 'scoped memory for tpu_custom_call.1']
    #allocation4 [shape = 's32[2]{0}', space=sflag, size = 0x8, scoped, tag = 'scoped memory for tpu_custom_call.1']
    #allocation5 [shape = 'u8[8192]{0}', space=vmem, size = 0x2000, scoped, tag = 'output window, operand 0']
    %8 = vsyncpa [#allocation3], 0
    %s9 = scalar_lea.sflag [#allocation3], 1
    %10 = vsyncpa %s9, 0
    %11 = vsyncpa [#allocation4], 0
    %s12 = scalar_lea.sflag [#allocation4], 1
    %13 = vsyncpa %s12, 0
    loop: start=0, step=1, limit=4
    $region2: #{tpu_custom_call.1} parent=1 // loop_pre_header
      _
    $region3: #{tpu_custom_call.1} parent=1 // loop_header
      %s15 = sphi 0, %s19
      %p16 = scmp.ge.s32.totalorder %s15, 4
      %s22 = sphi 0, %s34
      %s23 = sphi 0, %s30
      %s24 = sphi 0, %s22
      %s25 = sphi 0, %s23
      %s26 = sphi 0, %s24
      %s27 = sphi 0, %s25
      %s39 = sphi 0, %s41
      %s42 = sphi 0, %s39
      %s43 = sphi 0, %s42
      %s59 = sphi 0, %s43
      %s63 = sphi 0, %s63
      %s65 = sphi 0, %s63
      %s66 = sphi 0, %s65
      %s80 = sphi 0, %s66
      %s84 = sphi 0, %s84
      %s86 = sphi 0, %s84
      %s87 = sphi 0, %s86
      %s101 = sphi 0, %s87
      %s109 = sphi 0, %s111
      %s112 = sphi 0, %s109
      %s113 = sphi 0, %s112
      %s129 = sphi 0, %s113
    $region4: #{tpu_custom_call.1} parent=1 // loop_header_branch
      %18 = sbr.rel (%p16) target = $region8
    $region5: #{tpu_custom_call.1} parent=1 // loop_body
      %s20 = ssub.s32 %s15, 1
      %s21 = ssub.s32 %s15, 2
      %s28 = sadd.s32 1, %s23
      %p29 = scmp.ge.s32.totalorder %s28, 1
      %s30 = scalar_select %p29, 0, %s28
      %s31 = sadd.s32 1, %s22
      %s32 = scalar_select %p29, %s31, %s22
      %p33 = scmp.ge.s32.totalorder %s32, 2
      %s34 = scalar_select %p33, 0, %s32
      %s35 = ssub.s32 %s22, %s34
      %s36 = ssub.s32 %s23, %s30
      %s37 = sor.u32 %s35, %s36
      %p38 = scmp.eq.s32.totalorder %s37, 0
      %s40 = sadd.s32 %s39, 1
      %s41 = scalar_select %p38, %s39, %s40
      %p44 = pneg %p38
      %p45 = scmp.eq.s32.totalorder %s15, 1
      %p46 = por %p44, %p45
      %p47 = scmp.ne.s32.totalorder %s39, %s42
      %p48 = scmp.eq.s32.totalorder %s15, 0
      %p49 = por %p47, %p48
      %p50 = scmp.ne.s32.totalorder %s39, %s42
      %p51 = scmp.eq.s32.totalorder %s20, 1
      %p52 = por %p50, %p51
      %p53 = scmp.ne.s32.totalorder %s42, %s43
      %p54 = scmp.eq.s32.totalorder %s20, 0
      %p55 = por %p53, %p54
      %p56 = scmp.ne.s32.totalorder %s42, %s43
      %p57 = scmp.eq.s32.totalorder %s21, 1
      %p58 = por %p56, %p57
      %p60 = scmp.ne.s32.totalorder %s43, %s59
      %p61 = scmp.eq.s32.totalorder %s21, 0
      %p62 = por %p60, %p61
      %s64 = sadd.s32 %s63, 1
      %p67 = scmp.eq.s32.totalorder %s15, 1
      %p68 = scmp.ne.s32.totalorder %s63, %s65
      %p69 = scmp.eq.s32.totalorder %s15, 0
      %p70 = por %p68, %p69
      %p71 = scmp.ne.s32.totalorder %s63, %s65
      %p72 = scmp.eq.s32.totalorder %s20, 1
      %p73 = por %p71, %p72
      %p74 = scmp.ne.s32.totalorder %s65, %s66
      %p75 = scmp.eq.s32.totalorder %s20, 0
      %p76 = por %p74, %p75
      %p77 = scmp.ne.s32.totalorder %s65, %s66
      %p78 = scmp.eq.s32.totalorder %s21, 1
      %p79 = por %p77, %p78
      %p81 = scmp.ne.s32.totalorder %s66, %s80
      %p82 = scmp.eq.s32.totalorder %s21, 0
      %p83 = por %p81, %p82
      %s85 = sadd.s32 %s84, 1
      %p88 = scmp.eq.s32.totalorder %s15, 1
      %p89 = scmp.ne.s32.totalorder %s84, %s86
      %p90 = scmp.eq.s32.totalorder %s15, 0
      %p91 = por %p89, %p90
      %p92 = scmp.ne.s32.totalorder %s84, %s86
      %p93 = scmp.eq.s32.totalorder %s20, 1
      %p94 = por %p92, %p93
      %p95 = scmp.ne.s32.totalorder %s86, %s87
      %p96 = scmp.eq.s32.totalorder %s20, 0
      %p97 = por %p95, %p96
      %p98 = scmp.ne.s32.totalorder %s86, %s87
      %p99 = scmp.eq.s32.totalorder %s21, 1
      %p100 = por %p98, %p99
      %p102 = scmp.ne.s32.totalorder %s87, %s101
      %p103 = scmp.eq.s32.totalorder %s21, 0
      %p104 = por %p102, %p103
      %s105 = ssub.s32 %s22, %s34
      %s106 = ssub.s32 %s23, %s30
      %s107 = sor.u32 %s105, %s106
      %p108 = scmp.eq.s32.totalorder %s107, 0
      %s110 = sadd.s32 %s109, 1
      %s111 = scalar_select %p108, %s109, %s110
      %p114 = pneg %p108
      %p115 = scmp.eq.s32.totalorder %s15, 1
      %p116 = por %p114, %p115
      %p117 = scmp.ne.s32.totalorder %s109, %s112
      %p118 = scmp.eq.s32.totalorder %s15, 0
      %p119 = por %p117, %p118
      %p120 = scmp.ne.s32.totalorder %s109, %s112
      %p121 = scmp.eq.s32.totalorder %s20, 1
      %p122 = por %p120, %p121
      %p123 = scmp.ne.s32.totalorder %s112, %s113
      %p124 = scmp.eq.s32.totalorder %s20, 0
      %p125 = por %p123, %p124
      %p126 = scmp.ne.s32.totalorder %s112, %s113
      %p127 = scmp.eq.s32.totalorder %s21, 1
      %p128 = por %p126, %p127
      %p130 = scmp.ne.s32.totalorder %s113, %s129
      %p131 = scmp.eq.s32.totalorder %s21, 0
      %p132 = por %p130, %p131
      %p133 = scmp.le.s32.totalorder 1, %s15
      %p134 = scmp.lt.s32.totalorder %s15, 3
      %p135 = pnand %p133, %p134
      %p136 = pneg %p135
      // Predicated region
      $region9: #{tpu_custom_call.1} parent=5 // pred_check
        _
      $region10: #{tpu_custom_call.1} parent=5 // pred_check_branch
        %138 = sbr.rel (%p135) target = $region12
      $region11: #{tpu_custom_call.1} parent=5 // pred_region
        %s139 = ssub.s32 %s15, 1
        // Predicated region
        $region13: #{tpu_custom_call.1} parent=11 // pred_check
          %p140 = pneg %p76
        $region14: #{tpu_custom_call.1} parent=11 // pred_check_branch
          %142 = sbr.rel (%p140) target = $region16
        $region15: #{tpu_custom_call.1} parent=11 // pred_region
          _
        $region16: #{tpu_custom_call.1} parent=11 // pred_fallthru
          _
        // Predicated region
        $region17: #{tpu_custom_call.1} parent=11 // pred_check
          %p143 = pneg %p97
        $region18: #{tpu_custom_call.1} parent=11 // pred_check_branch
          %145 = sbr.rel (%p143) target = $region20
        $region19: #{tpu_custom_call.1} parent=11 // pred_region
          _
        $region20: #{tpu_custom_call.1} parent=11 // pred_fallthru
          _
      $region12: #{tpu_custom_call.1} parent=5 // pred_fallthru
        _
      %p146 = scmp.lt.s32.totalorder %s15, 2
      // Predicated region
      $region21: #{tpu_custom_call.1} parent=5 // pred_check
        %p147 = pneg %p146
      $region22: #{tpu_custom_call.1} parent=5 // pred_check_branch
        %149 = sbr.rel (%p147) target = $region24
      $region23: #{tpu_custom_call.1} parent=5 // pred_region
        // Predicated region
        $region25: #{tpu_custom_call.1} parent=23 // pred_check
          %p150 = pneg %p49
        $region26: #{tpu_custom_call.1} parent=23 // pred_check_branch
          %152 = sbr.rel (%p150) target = $region28
        $region27: #{tpu_custom_call.1} parent=23 // pred_region
          %s153 = sand.u32 %s39, 1
          %s154 = scalar_lea.sflag [#allocation3], %s153
          %s155 = sand.u32 %s39, 1
          %s156 = smul.addr %s155, 8
          %s157 = scalar_lea.vmem [#allocation2], %s156
          %s158 = smul.u32 2, %s23
          %160 = vsyncadd %s154, 0
          %s161 = smul.addr %s22, 2
          %s162 = sadd.s32 %s158, %s161
          %s163 = smul.addr %s162, 4
          %s164 = scalar_lea.hbm %s0, %s163
          %s166 = sshll.u32 %s164, 4
          %s167 = int_to_ptr.hbm [resolvable:$true] %s166
          %s168 = sshll.u32 %s157, 4
          %s169 = int_to_ptr.vmem [resolvable:$true] %s168
          %171 = dma.hbm_to_vmem [thread:$0]  %s167, 128, %s169, %s154
        $region28: #{tpu_custom_call.1} parent=23 // pred_fallthru
          _
      $region24: #{tpu_custom_call.1} parent=5 // pred_fallthru
        _
      %p172 = scmp.le.s32.totalorder 1, %s15
      %p173 = scmp.lt.s32.totalorder %s15, 3
      %p174 = pnand %p172, %p173
      %p175 = pneg %p174
      // Predicated region
      $region29: #{tpu_custom_call.1} parent=5 // pred_check
        _
      $region30: #{tpu_custom_call.1} parent=5 // pred_check_branch
        %177 = sbr.rel (%p174) target = $region32
      $region31: #{tpu_custom_call.1} parent=5 // pred_region
        %s178 = ssub.s32 %s15, 1
        %s179 = sand.u32 %s42, 1
        %s180 = scalar_lea.sflag [#allocation3], %s179
        %s181 = sand.u32 %s42, 1
        %s182 = smul.addr %s181, 8
        %s183 = scalar_lea.vmem [#allocation2], %s182
        // Predicated region
        $region33: #{tpu_custom_call.1} parent=31 // pred_check
          %p184 = pneg %p55
        $region34: #{tpu_custom_call.1} parent=31 // pred_check_branch
          %186 = sbr.rel (%p184) target = $region36
        $region35: #{tpu_custom_call.1} parent=31 // pred_region
          %188 = dma.done %s180, 128
        $region36: #{tpu_custom_call.1} parent=31 // pred_fallthru
          _
        %s189 = sand.u32 %s42, 1
        %s190 = scalar_lea.sflag [#allocation3], %s189
        %s191 = sand.u32 %s42, 1
        %s192 = smul.addr %s191, 8
        %s193 = scalar_lea.vmem [#allocation2], %s192
        %p194 = pneg %p55
        %p195 = pneg %p52
        %p196 = pneg %p76
        %p197 = pneg %p73
        %p198 = pneg %p97
        %p199 = pneg %p94
        %p200 = pneg %p125
        %p201 = pneg %p122
        %s202 = sand.u32 %s112, 1
        %s203 = scalar_lea.sflag [#allocation4], %s202
        %s204 = sand.u32 %s112, 1
        %s205 = smul.addr %s204, 8
        %s206 = scalar_lea.vmem [#allocation5], %s205
        %s207 = smul.u32 2, %s25
        %s208 = smul.u32 2, %s25
        %v209 = vld [vmem:[%s183] sm:$0xff]
        %211 = vst [vmem:[#allocation1] ss:$2 sm:$0xff] %v209
        %v212 = vld.sshfl [vmem:[#allocation1] sm:$0xff pattern:$0x75316420]
        %v213 = vld.sshfl [vmem:[#allocation1 + $0x8] sm:$0xff pattern:$0x75316420]
        %vm216 = vcmask 1043456
        %v217 = vsel %vm216, %v212, 0.0
        %v218 = vrot.slane %v217, 4
        %v219 = vadd.f32 %v217, %v218
        %v220 = vrot.slane %v219, 2
        %v221 = vadd.f32 %v219, %v220
        %v222 = vrot.slane %v221, 1
        %v223 = vadd.f32 %v221, %v222
        %v224 = vsel %vm216, %v213, 0.0
        %v225 = vrot.slane %v224, 4
        %v226 = vadd.f32 %v224, %v225
        %v227 = vrot.slane %v226, 2
        %v228 = vadd.f32 %v226, %v227
        %v229 = vrot.slane %v228, 1
        %v230 = vadd.f32 %v228, %v229
        %v231 = vrcp.pop 4.0
        %v232 = vmul.f32 4.0, %v231
        %v233 = vsub.f32 1.0, %v232
        %v234 = vmul.f32 %v231, %v233
        %v235 = vadd.f32 %v231, %v234
        %vm236 = vweird.f32 %v231
        %v237 = vsel %vm236, %v231, %v235
        %v238 = vmul.f32 %v223, %v237
        %v239 = vmul.f32 %v230, %v237
        %v242 = vrot.slane %v239, 4
        %v243 = vsel %vm216, %v238, %v242
        %v245 = vsub.f32 %v209, %v243
        %v246 = vmul.f32 %v245, %v245
        %248 = vst [vmem:[#allocation1] ss:$2 sm:$0xff] %v246
        %v249 = vld.sshfl [vmem:[#allocation1] sm:$0xff pattern:$0x75316420]
        %v250 = vld.sshfl [vmem:[#allocation1 + $0x8] sm:$0xff pattern:$0x75316420]
        %v253 = vsel %vm216, %v249, 0.0
        %v254 = vrot.slane %v253, 4
        %v255 = vadd.f32 %v253, %v254
        %v256 = vrot.slane %v255, 2
        %v257 = vadd.f32 %v255, %v256
        %v258 = vrot.slane %v257, 1
        %v259 = vadd.f32 %v257, %v258
        %v260 = vsel %vm216, %v250, 0.0
        %v261 = vrot.slane %v260, 4
        %v262 = vadd.f32 %v260, %v261
        %v263 = vrot.slane %v262, 2
        %v264 = vadd.f32 %v262, %v263
        %v265 = vrot.slane %v264, 1
        %v266 = vadd.f32 %v264, %v265
        %v267 = vmul.f32 %v259, %v237
        %v268 = vmul.f32 %v266, %v237
        %v269 = vadd.f32 %v267, 1e-06
        %v270 = vadd.f32 %v268, 1e-06
        %v271 = vrsqrt.pop %v269
        %v272 = vmul.f32 %v271, %v269
        %v273 = vmul.f32 %v272, %v271
        %v274 = vmul.f32 0.5, %v273
        %v275 = vsub.f32 1.5, %v274
        %v276 = vmul.f32 %v271, %v275
        %vm277 = vweird.f32 %v269
        %vm278 = vweird.f32 %v271
        %vm279 = vmor %vm277, %vm278
        %v280 = vsel %vm279, %v271, %v276
        %v281 = vrsqrt.pop %v270
        %v282 = vmul.f32 %v281, %v270
        %v283 = vmul.f32 %v282, %v281
        %v284 = vmul.f32 0.5, %v283
        %v285 = vsub.f32 1.5, %v284
        %v286 = vmul.f32 %v281, %v285
        %vm287 = vweird.f32 %v270
        %vm288 = vweird.f32 %v281
        %vm289 = vmor %vm287, %vm288
        %v290 = vsel %vm289, %v281, %v286
        %v291 = vld [vmem:[%s1] sm:$0xf]
        %v292 = vld [vmem:[%s2] sm:$0xf]
        %v295 = vrot.slane %v290, 4
        %v296 = vsel %vm216, %v280, %v295
        %v298 = vmul.f32 %v245, %v296
        %300 = vset.pattern.permute.xlu0 0
        %301 = vperm.xlu0 %300, %v291
        %v302 = vpop.permute.xlu0 %301
        %v304 = vunpack.c.l.s4 839922192
        %v305 = vunpack.c.0.s8 %v304
        %v306 = vperm.slane %v302, %v305
        %v308 = vmul.f32 %v298, %v306
        %310 = vset.pattern.permute.xlu0 0
        %311 = vperm.xlu0 %310, %v292
        %v312 = vpop.permute.xlu0 %311
        %v314 = vunpack.c.l.s4 839922192
        %v315 = vunpack.c.0.s8 %v314
        %v316 = vperm.slane %v312, %v315
        %v318 = vadd.f32 %v308, %v316
        %319 = vst [vmem:[%s206] sm:$0xff] %v318
        %s320 = sand.u32 %s112, 1
        %s321 = scalar_lea.sflag [#allocation4], %s320
        %s322 = sand.u32 %s112, 1
        %s323 = smul.addr %s322, 8
        %s324 = scalar_lea.vmem [#allocation5], %s323
        // Predicated region
        $region37: #{tpu_custom_call.1} parent=31 // pred_check
          %p325 = pneg %p122
        $region38: #{tpu_custom_call.1} parent=31 // pred_check_branch
          %327 = sbr.rel (%p325) target = $region40
        $region39: #{tpu_custom_call.1} parent=31 // pred_region
          %s328 = smul.u32 2, %s25
          %330 = vsyncadd %s321, 0
          %s331 = smul.addr %s24, 2
          %s332 = sadd.s32 %s328, %s331
          %s333 = smul.addr %s332, 4
          %s334 = scalar_lea.hbm %s3, %s333
          %s336 = sshll.u32 %s324, 4
          %s337 = int_to_ptr.vmem [resolvable:$true] %s336
          %s338 = sshll.u32 %s334, 4
          %s339 = int_to_ptr.hbm [resolvable:$true] %s338
          %341 = dma.vmem_to_hbm [thread:$0]  %s337, 128, %s339, %s321
        $region40: #{tpu_custom_call.1} parent=31 // pred_fallthru
          _
      $region32: #{tpu_custom_call.1} parent=5 // pred_fallthru
        _
      %p342 = scmp.le.s32.totalorder 2, %s15
      // Predicated region
      $region41: #{tpu_custom_call.1} parent=5 // pred_check
        %p343 = pneg %p342
      $region42: #{tpu_custom_call.1} parent=5 // pred_check_branch
        %345 = sbr.rel (%p343) target = $region44
      $region43: #{tpu_custom_call.1} parent=5 // pred_region
        %s346 = ssub.s32 %s15, 2
        // Predicated region
        $region45: #{tpu_custom_call.1} parent=43 // pred_check
          %p347 = pneg %p128
        $region46: #{tpu_custom_call.1} parent=43 // pred_check_branch
          %349 = sbr.rel (%p347) target = $region48
        $region47: #{tpu_custom_call.1} parent=43 // pred_region
          %s350 = sand.u32 %s113, 1
          %s351 = scalar_lea.sflag [#allocation4], %s350
          %s352 = sand.u32 %s113, 1
          %s353 = smul.addr %s352, 8
          %s354 = scalar_lea.vmem [#allocation5], %s353
          %356 = dma.done %s351, 128
        $region48: #{tpu_custom_call.1} parent=43 // pred_fallthru
          _
      $region44: #{tpu_custom_call.1} parent=5 // pred_fallthru
        _
    $region6: #{tpu_custom_call.1} parent=1 // loop_footer
      %s19 = sadd.s32 1, %s15
    $region7: #{tpu_custom_call.1} parent=1 // loop_footer_branch
      %14 = sbr.rel target = $region3
    $region8: #{tpu_custom_call.1} parent=1 // loop_exit
      _
    %357 = vsyncpa [#allocation3], 1
    %s358 = scalar_lea.sflag [#allocation3], 1
    %359 = vsyncpa %s358, 1
    %360 = vsyncpa [#allocation4], 1
    %s361 = scalar_lea.sflag [#allocation4], 1
    %362 = vsyncpa %s361, 1

</llo_original>
